<compile_context>
chip_gen: v7x
topology: tpu7x:2x2x1
jax: 0.10.0
libtpu: 0.0.40
codegen_flags: <defaults>
</compile_context>

<pallas_src>
import functools

import jax
import jax.numpy as jnp
from jax.experimental import pallas as pl
from jax.experimental.pallas import tpu as pltpu

LANE = 128  # TPU vreg lane width


def _round_up(x, m):
    return ((x + m - 1) // m) * m


def _pick_batch_tile(batch, batch_tile):
    """Tile must be a multiple of 128 (lane-dense output); cap it at ~half the
    batch so large batches keep >= 2 grid steps (v7x megacore)."""
    half = _round_up(max(1, (batch + 1) // 2), LANE)
    tile = min(_round_up(batch_tile, LANE), half)
    return max(tile, LANE)


def _qnetwork_kernel(s_ref, a_ref, w1_ref, b1_ref, w2_ref, b2_ref,
                     w3_ref, b3_ref, o_ref, *, act_dtype):
    mxu_dtype = w1_ref.dtype

    # Layer 1: fuse the [state, action] concat in-kernel (a couple of lane
    # shift/select ops, hidden under the matmul) -> single K=in_dim MXU matmul
    # with f32 accumulation.
    x = jnp.concatenate([s_ref[...], a_ref[...]], axis=-1).astype(mxu_dtype)
    h1 = jnp.dot(x, w1_ref[...], preferred_element_type=jnp.float32)
    h1 = jnp.maximum(h1.astype(act_dtype) + b1_ref[...].astype(act_dtype), 0.0)

    # Layer 2: (b_tile, H) @ (H, H) on the MXU, f32 accumulation.
    h2 = jnp.dot(h1.astype(w2_ref.dtype), w2_ref[...],
                 preferred_element_type=jnp.float32)
    h2 = jnp.maximum(h2.astype(act_dtype) + b2_ref[...].astype(act_dtype), 0.0)

    # Layer 3 (output width 1): skip the degenerate (H, 1) MXU matmul; VPU
    # multiply against the lane-dense (1, H) w3 row + XLU lane reduce, in f32.
    q = jnp.sum(h2.astype(jnp.float32) * w3_ref[...], axis=-1, keepdims=True)
    q = q + b3_ref[...]                                   # (b_tile, 1)

    # Lane-dense output: fold the batch into the lane axis so the writeback is
    # dense vst + a contiguous DMA instead of ~b_tile/8 masked partial stores.
    o_ref[...] = q.reshape(o_ref.shape)                   # (b_tile//128, 128)


def qnetwork_forward(state, action, packed_params, *, batch_tile=4096,
                     act_dtype=jnp.float32,
                     vmem_limit_bytes=48 * 1024 * 1024):
    """Pallas-backed Q(s, a) -> (batch, 1) float32.

    `packed_params` comes from `pack_params` (big weights pre-cast once).
    `act_dtype=jnp.bfloat16` is the v6e/v7x fast path; keep f32 on v5e.
    """
    w1, b1, w2, b2, w3, b3 = packed_params
    batch, state_dim = state.shape
    action_dim = action.shape[1]
    in_dim, hidden = w1.shape
    assert in_dim == state_dim + action_dim
    assert hidden % LANE == 0

    b_tile = _pick_batch_tile(batch, batch_tile)
    num_steps = pl.cdiv(batch, b_tile)          # ragged last block: no pad
    slabs_per_step = b_tile // LANE

    kernel = functools.partial(_qnetwork_kernel, act_dtype=act_dtype)

    def resident(shape):
        # Same block index every grid step -> stays resident in VMEM.
        return pl.BlockSpec(shape, lambda i, _s=shape: (0,) * len(_s))

    out = pl.pallas_call(
        kernel,
        out_shape=jax.ShapeDtypeStruct(
            (num_steps * slabs_per_step, LANE), jnp.float32),
        grid=(num_steps,),
        in_specs=[
            pl.BlockSpec((b_tile, state_dim), lambda i: (i, 0)),
            pl.BlockSpec((b_tile, action_dim), lambda i: (i, 0)),
            resident((in_dim, hidden)),      # W1  (packed, pre-cast)
            resident((1, hidden)),           # b1  (f32)
            resident((hidden, hidden)),      # W2  (pre-cast)
            resident((1, hidden)),           # b2  (f32)
            resident((1, hidden)),           # w3 row (f32, lane-dense)
            resident((1, 1)),                # b3  (f32)
        ],
        out_specs=pl.BlockSpec((slabs_per_step, LANE), lambda i: (i, 0)),
        compiler_params=pltpu.CompilerParams(
            dimension_semantics=("parallel",),
            vmem_limit_bytes=vmem_limit_bytes),
    )(state, action, w1, b1, w2, b2, w3, b3)

    # Unfold lanes back to (batch, 1); rows beyond `batch` (ragged last block
    # garbage) are discarded.
    return out.reshape(num_steps * b_tile, 1)[:batch]


def init_params(key, state_dim=6, action_dim=2, hidden_dim=256):
    """f32 master params mirroring PyTorch nn.Linear default init
    (uniform(-1/sqrt(fan_in), 1/sqrt(fan_in))); weights stored (in, out)."""
    in_dim = state_dim + action_dim
    keys = jax.random.split(key, 6)

    def lin(kw, kb, fan_in, fan_out):
        bound = 1.0 / jnp.sqrt(jnp.float32(fan_in))
        w = jax.random.uniform(kw, (fan_in, fan_out), jnp.float32, -bound, bound)
        b = jax.random.uniform(kb, (1, fan_out), jnp.float32, -bound, bound)
        return w, b

    w1, b1 = lin(keys[0], keys[1], in_dim, hidden_dim)
    w2, b2 = lin(keys[2], keys[3], hidden_dim, hidden_dim)
    w3, b3 = lin(keys[4], keys[5], hidden_dim, 1)
    return dict(w1=w1, b1=b1, w2=w2, b2=b2,
                w3=w3.reshape(1, hidden_dim), b3=b3)


def pack_params(params, compute_dtype=jnp.bfloat16):
    """Hoisted per-call casts: cast the big MXU weights once (per training
    step); biases / w3 / b3 stay f32 for the VPU/EUP path."""
    return (params["w1"].astype(compute_dtype),
            params["b1"].astype(jnp.float32),
            params["w2"].astype(compute_dtype),
            params["b2"].astype(jnp.float32),
            params["w3"].astype(jnp.float32),
            params["b3"].astype(jnp.float32))


def qnetwork_reference(state, action, params):
    """Plain-JAX reference, identical math to the PyTorch module."""
    x = jnp.concatenate([state, action], axis=-1).astype(jnp.float32)
    h1 = jnp.maximum(x @ params["w1"] + params["b1"], 0.0)
    h2 = jnp.maximum(h1 @ params["w2"] + params["b2"], 0.0)
    return h2 @ params["w3"].T + params["b3"]


if __name__ == "__main__":
    key = jax.random.PRNGKey(0)
    k_params, k_state, k_action, k_big = jax.random.split(key, 4)

    state_dim, action_dim, hidden_dim = 6, 2, 256
    batch = 4

    params = init_params(k_params, state_dim, action_dim, hidden_dim)
    state = jax.random.normal(k_state, (batch, state_dim), jnp.float32)
    action = jax.random.normal(k_action, (batch, action_dim), jnp.float32)
    ref = qnetwork_reference(state, action, params)

    # f32 weights: tight parity with the reference.
    packed_f32 = pack_params(params, jnp.float32)
    out_f32 = jax.block_until_ready(qnetwork_forward(state, action, packed_f32))
    assert out_f32.shape == (batch, 1), out_f32.shape
    assert jnp.allclose(out_f32, ref, atol=1e-4, rtol=1e-4), (out_f32, ref)

    # bf16 MXU weights (cast once in pack_params), f32 activations.
    packed_bf16 = pack_params(params, jnp.bfloat16)
    out_bf16 = jax.block_until_ready(qnetwork_forward(state, action, packed_bf16))
    assert out_bf16.shape == (batch, 1), out_bf16.shape
    assert jnp.allclose(out_bf16, ref, atol=5e-2, rtol=5e-2), (out_bf16, ref)

    # bf16 activations too (v6e/v7x fast path; still numerically valid on v5e).
    out_bf16_act = jax.block_until_ready(
        qnetwork_forward(state, action, packed_bf16, act_dtype=jnp.bfloat16))
    assert out_bf16_act.shape == (batch, 1), out_bf16_act.shape
    assert jnp.allclose(out_bf16_act, ref, atol=1e-1, rtol=1e-1), (out_bf16_act, ref)

    # Training-scale batch: tile = batch/2 -> 2 "parallel" grid steps
    # (megacore on v7x), weights VMEM-resident, lane-dense output slabs.
    kb_s, kb_a = jax.random.split(k_big)
    big_b = 2048
    big_state = jax.random.normal(kb_s, (big_b, state_dim), jnp.float32)
    big_action = jax.random.normal(kb_a, (big_b, action_dim), jnp.float32)
    big_ref = qnetwork_reference(big_state, big_action, params)
    out_big = jax.block_until_ready(
        qnetwork_forward(big_state, big_action, packed_f32))
    assert out_big.shape == (big_b, 1), out_big.shape
    assert jnp.allclose(out_big, big_ref, atol=1e-3, rtol=1e-3), "grid mismatch"

    # Ragged batch (not a multiple of 128 / the tile): exercises the
    # overrunning last block with no wrapper pad.
    rag_b = 300
    rag_state = jax.random.normal(kb_s, (rag_b, state_dim), jnp.float32)
    rag_action = jax.random.normal(kb_a, (rag_b, action_dim), jnp.float32)
    rag_ref = qnetwork_reference(rag_state, rag_action, params)
    out_rag = jax.block_until_ready(
        qnetwork_forward(rag_state, rag_action, packed_f32))
    assert out_rag.shape == (rag_b, 1), out_rag.shape
    assert jnp.allclose(out_rag, rag_ref, atol=1e-3, rtol=1e-3), "ragged mismatch"

    print("KERNEL_OK")
</pallas_src>

<mosaic_0001>
module attributes {stable_mosaic.version = 11 : i64} {
  func.func @_qnetwork_kernel(%arg0: i32, %arg1: memref<128x6xf32, #tpu.memory_space<vmem>>, %arg2: memref<128x2xf32, #tpu.memory_space<vmem>>, %arg3: memref<8x256xf32, #tpu.memory_space<vmem>>, %arg4: memref<1x256xf32, #tpu.memory_space<vmem>>, %arg5: memref<256x256xf32, #tpu.memory_space<vmem>>, %arg6: memref<1x256xf32, #tpu.memory_space<vmem>>, %arg7: memref<1x256xf32, #tpu.memory_space<vmem>>, %arg8: memref<1x1xf32, #tpu.memory_space<vmem>>, %arg9: memref<1x128xf32, #tpu.memory_space<vmem>>) attributes {dimension_semantics = [#tpu.dimension_semantics<parallel>], iteration_bounds = array<i64: 1>, scalar_prefetch = 0 : i64, scratch_operands = 0 : i64, tpu.core_type = #tpu.core_type<tc>, window_params = [{transform_indices = @transform_0, window_bounds = array<i64: 128, 6>}, {transform_indices = @transform_1, window_bounds = array<i64: 128, 2>}, {pipeline_mode = #tpu.pipeline_mode<synchronous>, transform_indices = @transform_2, window_bounds = array<i64: 8, 256>}, {pipeline_mode = #tpu.pipeline_mode<synchronous>, transform_indices = @transform_3, window_bounds = array<i64: 1, 256>}, {pipeline_mode = #tpu.pipeline_mode<synchronous>, transform_indices = @transform_4, window_bounds = array<i64: 256, 256>}, {pipeline_mode = #tpu.pipeline_mode<synchronous>, transform_indices = @transform_5, window_bounds = array<i64: 1, 256>}, {pipeline_mode = #tpu.pipeline_mode<synchronous>, transform_indices = @transform_6, window_bounds = array<i64: 1, 256>}, {pipeline_mode = #tpu.pipeline_mode<synchronous>, transform_indices = @transform_7, window_bounds = array<i64: 1, 1>}, {transform_indices = @transform_8, window_bounds = array<i64: 1, 128>}]} {
    %c0 = arith.constant 0 : index
    %c0_0 = arith.constant 0 : index
    %0 = vector.load %arg1[%c0, %c0_0] : memref<128x6xf32, #tpu.memory_space<vmem>>, vector<128x6xf32>
    %c0_1 = arith.constant 0 : index
    %c0_2 = arith.constant 0 : index
    %1 = vector.load %arg2[%c0_1, %c0_2] : memref<128x2xf32, #tpu.memory_space<vmem>>, vector<128x2xf32>
    %2 = tpu.concatenate %0, %1 in 1 : vector<128x6xf32>, vector<128x2xf32> -> vector<128x8xf32>
    %c0_3 = arith.constant 0 : index
    %c0_4 = arith.constant 0 : index
    %3 = vector.load %arg3[%c0_3, %c0_4] : memref<8x256xf32, #tpu.memory_space<vmem>>, vector<8x256xf32>
    %cst = arith.constant dense<0.000000e+00> : vector<128x256xf32>
    %4 = tpu.matmul %2, %3, %cst {dimension_numbers = #tpu.dot_dimension_numbers<[1], [0], [0], [1], [0, 0, 1, 1], [], []>} : vector<128x8xf32>, vector<8x256xf32>, vector<128x256xf32> -> vector<128x256xf32>
    %c0_5 = arith.constant 0 : index
    %c0_6 = arith.constant 0 : index
    %5 = vector.load %arg4[%c0_5, %c0_6] : memref<1x256xf32, #tpu.memory_space<vmem>>, vector<1x256xf32>
    %6 = vector.broadcast %5 : vector<1x256xf32> to vector<128x256xf32>
    %7 = arith.addf %4, %6 : vector<128x256xf32>
    %cst_7 = arith.constant 0.000000e+00 : f32
    %8 = vector.broadcast %cst_7 : f32 to vector<128x256xf32>
    %9 = arith.maximumf %7, %8 : vector<128x256xf32>
    %c0_8 = arith.constant 0 : index
    %c0_9 = arith.constant 0 : index
    %10 = vector.load %arg5[%c0_8, %c0_9] : memref<256x256xf32, #tpu.memory_space<vmem>>, vector<256x256xf32>
    %cst_10 = arith.constant dense<0.000000e+00> : vector<128x256xf32>
    %11 = tpu.matmul %9, %10, %cst_10 {dimension_numbers = #tpu.dot_dimension_numbers<[1], [0], [0], [1], [0, 0, 1, 1], [], []>} : vector<128x256xf32>, vector<256x256xf32>, vector<128x256xf32> -> vector<128x256xf32>
    %c0_11 = arith.constant 0 : index
    %c0_12 = arith.constant 0 : index
    %12 = vector.load %arg6[%c0_11, %c0_12] : memref<1x256xf32, #tpu.memory_space<vmem>>, vector<1x256xf32>
    %13 = vector.broadcast %12 : vector<1x256xf32> to vector<128x256xf32>
    %14 = arith.addf %11, %13 : vector<128x256xf32>
    %cst_13 = arith.constant 0.000000e+00 : f32
    %15 = vector.broadcast %cst_13 : f32 to vector<128x256xf32>
    %16 = arith.maximumf %14, %15 : vector<128x256xf32>
    %c0_14 = arith.constant 0 : index
    %c0_15 = arith.constant 0 : index
    %17 = vector.load %arg7[%c0_14, %c0_15] : memref<1x256xf32, #tpu.memory_space<vmem>>, vector<1x256xf32>
    %18 = vector.broadcast %17 : vector<1x256xf32> to vector<128x256xf32>
    %19 = arith.mulf %16, %18 : vector<128x256xf32>
    %cst_16 = arith.constant dense<0.000000e+00> : vector<128xf32>
    %20 = vector.multi_reduction <add>, %19, %cst_16 [1] : vector<128x256xf32> to vector<128xf32>
    %21 = vector.shape_cast %20 : vector<128xf32> to vector<128x1xf32>
    %c0_17 = arith.constant 0 : index
    %c0_18 = arith.constant 0 : index
    %22 = vector.load %arg8[%c0_17, %c0_18] : memref<1x1xf32, #tpu.memory_space<vmem>>, vector<1x1xf32>
    %23 = vector.broadcast %22 : vector<1x1xf32> to vector<128x1xf32>
    %24 = arith.addf %21, %23 : vector<128x1xf32>
    %25 = vector.shape_cast %24 : vector<128x1xf32> to vector<1x128xf32>
    %c0_19 = arith.constant 0 : index
    %c0_20 = arith.constant 0 : index
    %26 = vector.load %arg9[%c0_19, %c0_20] : memref<1x128xf32, #tpu.memory_space<vmem>>, vector<1x128xf32>
    tpu.vector_store %arg9[%c0_19, %c0_20], %25 {strides = array<i32>} : memref<1x128xf32, #tpu.memory_space<vmem>>, vector<1x128xf32>,
    return
  }
  func.func @transform_0(%arg0: i32) -> (i32, i32) {
    %c0_i32 = arith.constant 0 : i32
    %c0_i32_0 = arith.constant 0 : i32
    return %arg0, %c0_i32 : i32, i32
  }
  func.func @transform_1(%arg0: i32) -> (i32, i32) {
    %c0_i32 = arith.constant 0 : i32
    %c0_i32_0 = arith.constant 0 : i32
    return %arg0, %c0_i32 : i32, i32
  }
  func.func @transform_2(%arg0: i32) -> (i32, i32) {
    %c0_i32 = arith.constant 0 : i32
    %c0_i32_0 = arith.constant 0 : i32
    %c0_i32_1 = arith.constant 0 : i32
    return %c0_i32, %c0_i32_0 : i32, i32
  }
  func.func @transform_3(%arg0: i32) -> (i32, i32) {
    %c0_i32 = arith.constant 0 : i32
    %c0_i32_0 = arith.constant 0 : i32
    %c0_i32_1 = arith.constant 0 : i32
    return %c0_i32, %c0_i32_0 : i32, i32
  }
  func.func @transform_4(%arg0: i32) -> (i32, i32) {
    %c0_i32 = arith.constant 0 : i32
    %c0_i32_0 = arith.constant 0 : i32
    %c0_i32_1 = arith.constant 0 : i32
    return %c0_i32, %c0_i32_0 : i32, i32
  }
  func.func @transform_5(%arg0: i32) -> (i32, i32) {
    %c0_i32 = arith.constant 0 : i32
    %c0_i32_0 = arith.constant 0 : i32
    %c0_i32_1 = arith.constant 0 : i32
    return %c0_i32, %c0_i32_0 : i32, i32
  }
  func.func @transform_6(%arg0: i32) -> (i32, i32) {
    %c0_i32 = arith.constant 0 : i32
    %c0_i32_0 = arith.constant 0 : i32
    %c0_i32_1 = arith.constant 0 : i32
    return %c0_i32, %c0_i32_0 : i32, i32
  }
  func.func @transform_7(%arg0: i32) -> (i32, i32) {
    %c0_i32 = arith.constant 0 : i32
    %c0_i32_0 = arith.constant 0 : i32
    %c0_i32_1 = arith.constant 0 : i32
    return %c0_i32, %c0_i32_0 : i32, i32
  }
  func.func @transform_8(%arg0: i32) -> (i32, i32) {
    %c0_i32 = arith.constant 0 : i32
    %c0_i32_0 = arith.constant 0 : i32
    return %arg0, %c0_i32 : i32, i32
  }
}

</mosaic_0001>

<llo_original>
// kernel: tpu_custom_call.1
$region0: #{tpu_custom_call.1}
  #allocation0 [shape = 'u32[]', space=smem, size = 0x4, offset = 0x4, fixed_abs, tag = 'smem constant byte address 0x4 - core index']
  #allocation1 [shape = 'u32[144,128]{1,0:T(1,128)}', space=vmem, size = 0x12000, scoped, tag = 'internal scratch']
  #allocation2 [shape = 'f32[1,1]{1,0:T(1,128)S(1)}', space=vmem, size = 0x200, scoped, tag = 'scoped memory for tpu_custom_call.1']
  %s0 = inlined_call_operand.hbm [shape: f32[4,6], index: 0, kind: input, shape index: {}]
  %s1 = inlined_call_operand.vmem [shape: f32[4,2], index: 1, kind: input, shape index: {}]
  %s2 = inlined_call_operand.vmem [shape: f32[8,256], index: 2, kind: input, shape index: {}]
  %s3 = inlined_call_operand.vmem [shape: f32[1,256], index: 3, kind: input, shape index: {}]
  %s4 = inlined_call_operand.hbm [shape: f32[256,256], index: 4, kind: input, shape index: {}]
  %s5 = inlined_call_operand.vmem [shape: f32[1,256], index: 5, kind: input, shape index: {}]
  %s6 = inlined_call_operand.vmem [shape: f32[1,256], index: 6, kind: input, shape index: {}]
  %s7 = inlined_call_operand.<no memory space> [shape: f32[1,1], index: 7, kind: input, shape index: {}]
  %s8 = inlined_call_operand.hbm [shape: f32[1,128], index: 8, kind: output, shape index: {}]
  %s9 = sld [smem:[#allocation0]]
  $region50: #{tpu_custom_call.1} parent=0
    _
  %s11 = ssub.s32 1, %s9
  %s12 = scalar_select 0, %s11, %s9
  %v13 = vstv %s7
  %14 = vst [vmem:[#allocation2] sm:$0x1] %v13
  $region1: #{tpu_custom_call.1} parent=0
    #allocation3 [shape = 'u8[65536]{0}', space=vmem, size = 0x10000, scoped, tag = 'input window, operand 0, single buffered']
    #allocation4 [shape = 's32[1]{0}', space=sflag, size = 0x4, scoped, tag = 'scoped memory for tpu_custom_call.1']
    #allocation5 [shape = 's32[1]{0}', space=sflag, size = 0x4, scoped, tag = 'scoped memory for tpu_custom_call.1']
    #allocation6 [shape = 'u8[262144]{0}', space=vmem, size = 0x40000, scoped, tag = 'input window, operand 4, single buffered']
    #allocation7 [shape = 's32[1]{0}', space=sflag, size = 0x4, scoped, tag = 'scoped memory for tpu_custom_call.1']
    #allocation8 [shape = 'u8[512]{0}', space=vmem, size = 0x400, scoped, tag = 'output window, operand 0, single buffered']
    %15 = vsyncpa [#allocation4], 0
    %16 = vsyncpa [#allocation7], 0
    %17 = vsyncpa [#allocation5], 0
    // Predicated region
    $region2: #{tpu_custom_call.1} parent=1 // pred_check
      _
    $region3: #{tpu_custom_call.1} parent=1 // pred_check_branch
      %19 = sbr.rel (0) target = $region5
    $region4: #{tpu_custom_call.1} parent=1 // pred_region
      %s21 = ssub.s32 2048, 64
      %22 = vsyncadd [#allocation4], %s21
      %s23 = sshll.u32 [#allocation3], 4
      %s24 = int_to_ptr.vmem [resolvable:$true] %s23
      %29 = dma.hbm_to_vmem [thread:$0]  %s0, 64, %s24, [#allocation4], 64, 64, 4
    $region5: #{tpu_custom_call.1} parent=1 // pred_fallthru
      _
    // Predicated region
    $region6: #{tpu_custom_call.1} parent=1 // pred_check
      _
    $region7: #{tpu_custom_call.1} parent=1 // pred_check_branch
      %31 = sbr.rel (0) target = $region9
    $region8: #{tpu_custom_call.1} parent=1 // pred_region
      _
    $region9: #{tpu_custom_call.1} parent=1 // pred_fallthru
      _
    // Predicated region
    $region10: #{tpu_custom_call.1} parent=1 // pred_check
      _
    $region11: #{tpu_custom_call.1} parent=1 // pred_check_branch
      %33 = sbr.rel (0) target = $region13
    $region12: #{tpu_custom_call.1} parent=1 // pred_region
      _
    $region13: #{tpu_custom_call.1} parent=1 // pred_fallthru
      _
    // Predicated region
    $region14: #{tpu_custom_call.1} parent=1 // pred_check
      _
    $region15: #{tpu_custom_call.1} parent=1 // pred_check_branch
      %35 = sbr.rel (0) target = $region17
    $region16: #{tpu_custom_call.1} parent=1 // pred_region
      _
    $region17: #{tpu_custom_call.1} parent=1 // pred_fallthru
      _
    // Predicated region
    $region18: #{tpu_custom_call.1} parent=1 // pred_check
      _
    $region19: #{tpu_custom_call.1} parent=1 // pred_check_branch
      %37 = sbr.rel (0) target = $region21
    $region20: #{tpu_custom_call.1} parent=1 // pred_region
      %s39 = ssub.s32 8192, 8192
      %40 = vsyncadd [#allocation7], %s39
      %s41 = sshll.u32 [#allocation6], 4
      %s42 = int_to_ptr.vmem [resolvable:$true] %s41
      %47 = dma.hbm_to_vmem [thread:$0]  %s4, 8192, %s42, [#allocation7], 256, 256, 16
    $region21: #{tpu_custom_call.1} parent=1 // pred_fallthru
      _
    // Predicated region
    $region22: #{tpu_custom_call.1} parent=1 // pred_check
      _
    $region23: #{tpu_custom_call.1} parent=1 // pred_check_branch
      %49 = sbr.rel (0) target = $region25
    $region24: #{tpu_custom_call.1} parent=1 // pred_region
      _
    $region25: #{tpu_custom_call.1} parent=1 // pred_fallthru
      _
    // Predicated region
    $region26: #{tpu_custom_call.1} parent=1 // pred_check
      _
    $region27: #{tpu_custom_call.1} parent=1 // pred_check_branch
      %51 = sbr.rel (0) target = $region29
    $region28: #{tpu_custom_call.1} parent=1 // pred_region
      _
    $region29: #{tpu_custom_call.1} parent=1 // pred_fallthru
      _
    // Predicated region
    $region30: #{tpu_custom_call.1} parent=1 // pred_check
      _
    $region31: #{tpu_custom_call.1} parent=1 // pred_check_branch
      %53 = sbr.rel (0) target = $region33
    $region32: #{tpu_custom_call.1} parent=1 // pred_region
      _
    $region33: #{tpu_custom_call.1} parent=1 // pred_fallthru
      _
    // Predicated region
    $region34: #{tpu_custom_call.1} parent=1 // pred_check
      _
    $region35: #{tpu_custom_call.1} parent=1 // pred_check_branch
      %55 = sbr.rel (0) target = $region37
    $region36: #{tpu_custom_call.1} parent=1 // pred_region
      %56 = dma.done [#allocation4], 2048
    $region37: #{tpu_custom_call.1} parent=1 // pred_fallthru
      _
    // Predicated region
    $region38: #{tpu_custom_call.1} parent=1 // pred_check
      _
    $region39: #{tpu_custom_call.1} parent=1 // pred_check_branch
      %58 = sbr.rel (0) target = $region41
    $region40: #{tpu_custom_call.1} parent=1 // pred_region
      %59 = dma.done [#allocation7], 8192
    $region41: #{tpu_custom_call.1} parent=1 // pred_fallthru
      _
    %v60 = vld [vmem:[#allocation3] sm:$0xff]
    %v61 = vld [vmem:[#allocation3 + $0x8] sm:$0xff]
    %v62 = vld [vmem:[#allocation3 + $0x10] sm:$0xff]
    %v63 = vld [vmem:[#allocation3 + $0x18] sm:$0xff]
    %v64 = vld [vmem:[#allocation3 + $0x20] sm:$0xff]
    %v65 = vld [vmem:[#allocation3 + $0x28] sm:$0xff]
    %v66 = vld [vmem:[#allocation3 + $0x30] sm:$0xff]
    %v67 = vld [vmem:[#allocation3 + $0x38] sm:$0xff]
    %v68 = vld [vmem:[#allocation3 + $0x40] sm:$0xff]
    %v69 = vld [vmem:[#allocation3 + $0x48] sm:$0xff]
    %v70 = vld [vmem:[#allocation3 + $0x50] sm:$0xff]
    %v71 = vld [vmem:[#allocation3 + $0x58] sm:$0xff]
    %v72 = vld [vmem:[#allocation3 + $0x60] sm:$0xff]
    %v73 = vld [vmem:[#allocation3 + $0x68] sm:$0xff]
    %v74 = vld [vmem:[#allocation3 + $0x70] sm:$0xff]
    %v75 = vld [vmem:[#allocation3 + $0x78] sm:$0xff]
    %v76 = vld [vmem:[%s1] sm:$0xff]
    %v77 = vld [vmem:[%s1 + $0x8] sm:$0xff]
    %v78 = vld [vmem:[%s1 + $0x10] sm:$0xff]
    %v79 = vld [vmem:[%s1 + $0x18] sm:$0xff]
    %v80 = vld [vmem:[%s1 + $0x20] sm:$0xff]
    %v81 = vld [vmem:[%s1 + $0x28] sm:$0xff]
    %v82 = vld [vmem:[%s1 + $0x30] sm:$0xff]
    %v83 = vld [vmem:[%s1 + $0x38] sm:$0xff]
    %v84 = vld [vmem:[%s1 + $0x40] sm:$0xff]
    %v85 = vld [vmem:[%s1 + $0x48] sm:$0xff]
    %v86 = vld [vmem:[%s1 + $0x50] sm:$0xff]
    %v87 = vld [vmem:[%s1 + $0x58] sm:$0xff]
    %v88 = vld [vmem:[%s1 + $0x60] sm:$0xff]
    %v89 = vld [vmem:[%s1 + $0x68] sm:$0xff]
    %v90 = vld [vmem:[%s1 + $0x70] sm:$0xff]
    %v91 = vld [vmem:[%s1 + $0x78] sm:$0xff]
    %108 = vrot.lane.b32.xlu0 %v76, 6
    %v109 = vpop.permute.xlu0 %108
    %110 = vrot.lane.b32.xlu0 %v77, 6
    %v111 = vpop.permute.xlu0 %110
    %112 = vrot.lane.b32.xlu0 %v78, 6
    %v113 = vpop.permute.xlu0 %112
    %114 = vrot.lane.b32.xlu0 %v79, 6
    %v115 = vpop.permute.xlu0 %114
    %116 = vrot.lane.b32.xlu0 %v80, 6
    %v117 = vpop.permute.xlu0 %116
    %118 = vrot.lane.b32.xlu0 %v81, 6
    %v119 = vpop.permute.xlu0 %118
    %120 = vrot.lane.b32.xlu0 %v82, 6
    %v121 = vpop.permute.xlu0 %120
    %122 = vrot.lane.b32.xlu0 %v83, 6
    %v123 = vpop.permute.xlu0 %122
    %124 = vrot.lane.b32.xlu0 %v84, 6
    %v125 = vpop.permute.xlu0 %124
    %126 = vrot.lane.b32.xlu0 %v85, 6
    %v127 = vpop.permute.xlu0 %126
    %128 = vrot.lane.b32.xlu0 %v86, 6
    %v129 = vpop.permute.xlu0 %128
    %130 = vrot.lane.b32.xlu0 %v87, 6
    %v131 = vpop.permute.xlu0 %130
    %132 = vrot.lane.b32.xlu0 %v88, 6
    %v133 = vpop.permute.xlu0 %132
    %134 = vrot.lane.b32.xlu0 %v89, 6
    %v135 = vpop.permute.xlu0 %134
    %136 = vrot.lane.b32.xlu0 %v90, 6
    %v137 = vpop.permute.xlu0 %136
    %138 = vrot.lane.b32.xlu0 %v91, 6
    %v139 = vpop.permute.xlu0 %138
    %vm156 = vcmask 48128
    %v157 = vsel %vm156, %v60, %v109
    %v158 = vsel %vm156, %v61, %v111
    %v159 = vsel %vm156, %v62, %v113
    %v160 = vsel %vm156, %v63, %v115
    %v161 = vsel %vm156, %v64, %v117
    %v162 = vsel %vm156, %v65, %v119
    %v163 = vsel %vm156, %v66, %v121
    %v164 = vsel %vm156, %v67, %v123
    %v165 = vsel %vm156, %v68, %v125
    %v166 = vsel %vm156, %v69, %v127
    %v167 = vsel %vm156, %v70, %v129
    %v168 = vsel %vm156, %v71, %v131
    %v169 = vsel %vm156, %v72, %v133
    %v170 = vsel %vm156, %v73, %v135
    %v171 = vsel %vm156, %v74, %v137
    %v172 = vsel %vm156, %v75, %v139
    %v173 = vld [vmem:[%s2] sm:$0xff]
    %v174 = vld [vmem:[%s2 + $0x8] sm:$0xff]
    %v175 = vld [vmem:[%s3] sm:$0x3]
    %v177 = vlaneseq
    %v178 = vshrl.u32 %v177, 7
    %v179 = vsub.s32 0, %v178
    %v180 = vrot.slane %v175, %v179
    %v181 = vlaneseq
    %v182 = vshrl.u32 %v181, 7
    %v183 = vsub.s32 1, %v182
    %v184 = vrot.slane %v175, %v183
    %vm187 = vcmask 64512
    %v189 = vsel %vm187, %v157, 0
    %v192 = vsel %vm187, %v158, 0
    %v195 = vsel %vm187, %v159, 0
    %v198 = vsel %vm187, %v160, 0
    %v201 = vsel %vm187, %v161, 0
    %v204 = vsel %vm187, %v162, 0
    %v207 = vsel %vm187, %v163, 0
    %v210 = vsel %vm187, %v164, 0
    %v213 = vsel %vm187, %v165, 0
    %v216 = vsel %vm187, %v166, 0
    %v219 = vsel %vm187, %v167, 0
    %v222 = vsel %vm187, %v168, 0
    %v225 = vsel %vm187, %v169, 0
    %v228 = vsel %vm187, %v170, 0
    %v231 = vsel %vm187, %v171, 0
    %v234 = vsel %vm187, %v172, 0
    %236 = vmatprep.subr.mxu0 %v174
    %237 = vmatpush1.msra.mxu0 %v173
    %238 = vmatprep.subr.mxu0 0.0
    %239 = vmatpush1.msra.mxu0 0.0
    %240 = vmatprep.subr.mxu0 0.0
    %241 = vmatpush1.msra.mxu0 0.0
    %242 = vmatprep.subr.mxu0 0.0
    %243 = vmatpush1.msra.mxu0 0.0
    %244 = vmatprep.subr.mxu0 0.0
    %245 = vmatpush1.msra.mxu0 0.0
    %246 = vmatprep.subr.mxu0 0.0
    %247 = vmatpush1.msra.mxu0 0.0
    %248 = vmatprep.subr.mxu0 0.0
    %249 = vmatpush1.msra.mxu0 0.0
    %250 = vmatprep.subr.mxu0 0.0
    %251 = vmatpush1.msra.mxu0 0.0
    %252 = vmatprep.subr.mxu0 0.0
    %253 = vmatpush1.msra.mxu0 0.0
    %254 = vmatprep.subr.mxu0 0.0
    %255 = vmatpush1.msra.mxu0 0.0
    %256 = vmatprep.subr.mxu0 0.0
    %257 = vmatpush1.msra.mxu0 0.0
    %258 = vmatprep.subr.mxu0 0.0
    %259 = vmatpush1.msra.mxu0 0.0
    %260 = vmatprep.subr.mxu0 0.0
    %261 = vmatpush1.msra.mxu0 0.0
    %262 = vmatprep.subr.mxu0 0.0
    %263 = vmatpush1.msra.mxu0 0.0
    %264 = vmatprep.subr.mxu0 0.0
    %265 = vmatpush1.msra.mxu0 0.0
    %266 = vmatprep.subr.mxu0 0.0
    %267 = vmatpush1.msra.mxu0 0.0
    %268 = vmatprep.subr.mxu0 0.0
    %269 = vmatpush1.msra.mxu0 0.0
    %270 = vmatprep.subr.mxu0 0.0
    %271 = vmatpush1.msra.mxu0 0.0
    %272 = vmatprep.subr.mxu0 0.0
    %273 = vmatpush1.msra.mxu0 0.0
    %274 = vmatprep.subr.mxu0 0.0
    %275 = vmatpush1.msra.mxu0 0.0
    %276 = vmatprep.subr.mxu0 0.0
    %277 = vmatpush1.msra.mxu0 0.0
    %278 = vmatprep.subr.mxu0 0.0
    %279 = vmatpush1.msra.mxu0 0.0
    %280 = vmatprep.subr.mxu0 0.0
    %281 = vmatpush1.msra.mxu0 0.0
    %282 = vmatprep.subr.mxu0 0.0
    %283 = vmatpush1.msra.mxu0 0.0
    %284 = vmatprep.subr.mxu0 0.0
    %285 = vmatpush1.msra.mxu0 0.0
    %286 = vmatprep.subr.mxu0 0.0
    %287 = vmatpush1.msra.mxu0 0.0
    %288 = vmatprep.subr.mxu0 0.0
    %289 = vmatpush1.msra.mxu0 0.0
    %290 = vmatprep.subr.mxu0 0.0
    %291 = vmatpush1.msra.mxu0 0.0
    %292 = vmatprep.subr.mxu0 0.0
    %293 = vmatpush1.msra.mxu0 0.0
    %294 = vmatprep.subr.mxu0 0.0
    %295 = vmatpush1.msra.mxu0 0.0
    %296 = vmatprep.subr.mxu0 0.0
    %297 = vmatpush1.msra.mxu0 0.0
    %298 = vmatprep.subr.mxu0 0.0
    %299 = vmatpush1.msra.mxu0 0.0
    %300 = vmatprep.mubr.f32.mxu0 0.0
    %301 = vmatmul.mubr.f32.gmra.mrb[0].mxu0 %v189
    %v302 = vpop.f32.mrb[0].mxu0
    %v303 = vadd.f32 %v180, %v302
    %v304 = vpop.f32.mrb[0].mxu0
    %v305 = vadd.f32 %v184, %v304
    %306 = vmatprep.mubr.f32.mxu0 0.0
    %307 = vmatmul.mubr.f32.gmra.mrb[0].mxu0 %v192
    %v308 = vpop.f32.mrb[0].mxu0
    %v309 = vadd.f32 %v180, %v308
    %v310 = vpop.f32.mrb[0].mxu0
    %v311 = vadd.f32 %v184, %v310
    %312 = vmatprep.mubr.f32.mxu0 0.0
    %313 = vmatmul.mubr.f32.gmra.mrb[0].mxu0 %v195
    %v314 = vpop.f32.mrb[0].mxu0
    %v315 = vadd.f32 %v180, %v314
    %v316 = vpop.f32.mrb[0].mxu0
    %v317 = vadd.f32 %v184, %v316
    %318 = vmatprep.mubr.f32.mxu0 0.0
    %319 = vmatmul.mubr.f32.gmra.mrb[0].mxu0 %v198
    %v320 = vpop.f32.mrb[0].mxu0
    %v321 = vadd.f32 %v180, %v320
    %v322 = vpop.f32.mrb[0].mxu0
    %v323 = vadd.f32 %v184, %v322
    %324 = vmatprep.mubr.f32.mxu0 0.0
    %325 = vmatmul.mubr.f32.gmra.mrb[0].mxu0 %v201
    %v326 = vpop.f32.mrb[0].mxu0
    %v327 = vadd.f32 %v180, %v326
    %v328 = vpop.f32.mrb[0].mxu0
    %v329 = vadd.f32 %v184, %v328
    %330 = vmatprep.mubr.f32.mxu0 0.0
    %331 = vmatmul.mubr.f32.gmra.mrb[0].mxu0 %v204
    %v332 = vpop.f32.mrb[0].mxu0
    %v333 = vadd.f32 %v180, %v332
    %v334 = vpop.f32.mrb[0].mxu0
    %v335 = vadd.f32 %v184, %v334
    %336 = vmatprep.mubr.f32.mxu0 0.0
    %337 = vmatmul.mubr.f32.gmra.mrb[0].mxu0 %v207
    %v338 = vpop.f32.mrb[0].mxu0
    %v339 = vadd.f32 %v180, %v338
    %v340 = vpop.f32.mrb[0].mxu0
    %v341 = vadd.f32 %v184, %v340
    %342 = vmatprep.mubr.f32.mxu0 0.0
    %343 = vmatmul.mubr.f32.gmra.mrb[0].mxu0 %v210
    %v344 = vpop.f32.mrb[0].mxu0
    %v345 = vadd.f32 %v180, %v344
    %v346 = vpop.f32.mrb[0].mxu0
    %v347 = vadd.f32 %v184, %v346
    %348 = vmatprep.mubr.f32.mxu0 0.0
    %349 = vmatmul.mubr.f32.gmra.mrb[0].mxu0 %v213
    %v350 = vpop.f32.mrb[0].mxu0
    %v351 = vadd.f32 %v180, %v350
    %v352 = vpop.f32.mrb[0].mxu0
    %v353 = vadd.f32 %v184, %v352
    %354 = vmatprep.mubr.f32.mxu0 0.0
    %355 = vmatmul.mubr.f32.gmra.mrb[0].mxu0 %v216
    %v356 = vpop.f32.mrb[0].mxu0
    %v357 = vadd.f32 %v180, %v356
    %v358 = vpop.f32.mrb[0].mxu0
    %v359 = vadd.f32 %v184, %v358
    %360 = vmatprep.mubr.f32.mxu0 0.0
    %361 = vmatmul.mubr.f32.gmra.mrb[0].mxu0 %v219
    %v362 = vpop.f32.mrb[0].mxu0
    %v363 = vadd.f32 %v180, %v362
    %v364 = vpop.f32.mrb[0].mxu0
    %v365 = vadd.f32 %v184, %v364
    %366 = vmatprep.mubr.f32.mxu0 0.0
    %367 = vmatmul.mubr.f32.gmra.mrb[0].mxu0 %v222
    %v368 = vpop.f32.mrb[0].mxu0
    %v369 = vadd.f32 %v180, %v368
    %v370 = vpop.f32.mrb[0].mxu0
    %v371 = vadd.f32 %v184, %v370
    %372 = vmatprep.mubr.f32.mxu0 0.0
    %373 = vmatmul.mubr.f32.gmra.mrb[0].mxu0 %v225
    %v374 = vpop.f32.mrb[0].mxu0
    %v375 = vadd.f32 %v180, %v374
    %v376 = vpop.f32.mrb[0].mxu0
    %v377 = vadd.f32 %v184, %v376
    %378 = vmatprep.mubr.f32.mxu0 0.0
    %379 = vmatmul.mubr.f32.gmra.mrb[0].mxu0 %v228
    %v380 = vpop.f32.mrb[0].mxu0
    %v381 = vadd.f32 %v180, %v380
    %v382 = vpop.f32.mrb[0].mxu0
    %v383 = vadd.f32 %v184, %v382
    %384 = vmatprep.mubr.f32.mxu0 0.0
    %385 = vmatmul.mubr.f32.gmra.mrb[0].mxu0 %v231
    %v386 = vpop.f32.mrb[0].mxu0
    %v387 = vadd.f32 %v180, %v386
    %v388 = vpop.f32.mrb[0].mxu0
    %v389 = vadd.f32 %v184, %v388
    %390 = vmatprep.mubr.f32.mxu0 0.0
    %391 = vmatmul.mubr.f32.gmra.mrb[0].mxu0 %v234
    %v392 = vpop.f32.mrb[0].mxu0
    %v393 = vadd.f32 %v180, %v392
    %v394 = vpop.f32.mrb[0].mxu0
    %v395 = vadd.f32 %v184, %v394
    %396 = vdwg.mxu0
    %v397 = vmax.f32 %v303, 0.0
    %v398 = vmax.f32 %v305, 0.0
    %v399 = vmax.f32 %v309, 0.0
    %v400 = vmax.f32 %v311, 0.0
    %v401 = vmax.f32 %v315, 0.0
    %v402 = vmax.f32 %v317, 0.0
    %v403 = vmax.f32 %v321, 0.0
    %v404 = vmax.f32 %v323, 0.0
    %v405 = vmax.f32 %v327, 0.0
    %v406 = vmax.f32 %v329, 0.0
    %v407 = vmax.f32 %v333, 0.0
    %v408 = vmax.f32 %v335, 0.0
    %v409 = vmax.f32 %v339, 0.0
    %v410 = vmax.f32 %v341, 0.0
    %v411 = vmax.f32 %v345, 0.0
    %v412 = vmax.f32 %v347, 0.0
    %v413 = vmax.f32 %v351, 0.0
    %v414 = vmax.f32 %v353, 0.0
    %v415 = vmax.f32 %v357, 0.0
    %v416 = vmax.f32 %v359, 0.0
    %v417 = vmax.f32 %v363, 0.0
    %v418 = vmax.f32 %v365, 0.0
    %v419 = vmax.f32 %v369, 0.0
    %v420 = vmax.f32 %v371, 0.0
    %v421 = vmax.f32 %v375, 0.0
    %v422 = vmax.f32 %v377, 0.0
    %v423 = vmax.f32 %v381, 0.0
    %v424 = vmax.f32 %v383, 0.0
    %v425 = vmax.f32 %v387, 0.0
    %v426 = vmax.f32 %v389, 0.0
    %v427 = vmax.f32 %v393, 0.0
    %v428 = vmax.f32 %v395, 0.0
    %v429 = vld [vmem:[#allocation6] sm:$0xff]
    %v430 = vld [vmem:[#allocation6 + $0x8] sm:$0xff]
    %v431 = vld [vmem:[#allocation6 + $0x10] sm:$0xff]
    %v432 = vld [vmem:[#allocation6 + $0x18] sm:$0xff]
    %v433 = vld [vmem:[#allocation6 + $0x20] sm:$0xff]
    %v434 = vld [vmem:[#allocation6 + $0x28] sm:$0xff]
    %v435 = vld [vmem:[#allocation6 + $0x30] sm:$0xff]
    %v436 = vld [vmem:[#allocation6 + $0x38] sm:$0xff]
    %v437 = vld [vmem:[#allocation6 + $0x40] sm:$0xff]
    %v438 = vld [vmem:[#allocation6 + $0x48] sm:$0xff]
    %v439 = vld [vmem:[#allocation6 + $0x50] sm:$0xff]
    %v440 = vld [vmem:[#allocation6 + $0x58] sm:$0xff]
    %v441 = vld [vmem:[#allocation6 + $0x60] sm:$0xff]
    %v442 = vld [vmem:[#allocation6 + $0x68] sm:$0xff]
    %v443 = vld [vmem:[#allocation6 + $0x70] sm:$0xff]
    %v444 = vld [vmem:[#allocation6 + $0x78] sm:$0xff]
    %v445 = vld [vmem:[#allocation6 + $0x80] sm:$0xff]
    %v446 = vld [vmem:[#allocation6 + $0x88] sm:$0xff]
    %v447 = vld [vmem:[#allocation6 + $0x90] sm:$0xff]
    %v448 = vld [vmem:[#allocation6 + $0x98] sm:$0xff]
    %v449 = vld [vmem:[#allocation6 + $0xa0] sm:$0xff]
    %v450 = vld [vmem:[#allocation6 + $0xa8] sm:$0xff]
    %v451 = vld [vmem:[#allocation6 + $0xb0] sm:$0xff]
    %v452 = vld [vmem:[#allocation6 + $0xb8] sm:$0xff]
    %v453 = vld [vmem:[#allocation6 + $0xc0] sm:$0xff]
    %v454 = vld [vmem:[#allocation6 + $0xc8] sm:$0xff]
    %v455 = vld [vmem:[#allocation6 + $0xd0] sm:$0xff]
    %v456 = vld [vmem:[#allocation6 + $0xd8] sm:$0xff]
    %v457 = vld [vmem:[#allocation6 + $0xe0] sm:$0xff]
    %v458 = vld [vmem:[#allocation6 + $0xe8] sm:$0xff]
    %v459 = vld [vmem:[#allocation6 + $0xf0] sm:$0xff]
    %v460 = vld [vmem:[#allocation6 + $0xf8] sm:$0xff]
    %v461 = vld [vmem:[#allocation6 + $0x100] sm:$0xff]
    %v462 = vld [vmem:[#allocation6 + $0x108] sm:$0xff]
    %v463 = vld [vmem:[#allocation6 + $0x110] sm:$0xff]
    %v464 = vld [vmem:[#allocation6 + $0x118] sm:$0xff]
    %v465 = vld [vmem:[#allocation6 + $0x120] sm:$0xff]
    %v466 = vld [vmem:[#allocation6 + $0x128] sm:$0xff]
    %v467 = vld [vmem:[#allocation6 + $0x130] sm:$0xff]
    %v468 = vld [vmem:[#allocation6 + $0x138] sm:$0xff]
    %v469 = vld [vmem:[#allocation6 + $0x140] sm:$0xff]
    %v470 = vld [vmem:[#allocation6 + $0x148] sm:$0xff]
    %v471 = vld [vmem:[#allocation6 + $0x150] sm:$0xff]
    %v472 = vld [vmem:[#allocation6 + $0x158] sm:$0xff]
    %v473 = vld [vmem:[#allocation6 + $0x160] sm:$0xff]
    %v474 = vld [vmem:[#allocation6 + $0x168] sm:$0xff]
    %v475 = vld [vmem:[#allocation6 + $0x170] sm:$0xff]
    %v476 = vld [vmem:[#allocation6 + $0x178] sm:$0xff]
    %v477 = vld [vmem:[#allocation6 + $0x180] sm:$0xff]
    %v478 = vld [vmem:[#allocation6 + $0x188] sm:$0xff]
    %v479 = vld [vmem:[#allocation6 + $0x190] sm:$0xff]
    %v480 = vld [vmem:[#allocation6 + $0x198] sm:$0xff]
    %v481 = vld [vmem:[#allocation6 + $0x1a0] sm:$0xff]
    %v482 = vld [vmem:[#allocation6 + $0x1a8] sm:$0xff]
    %v483 = vld [vmem:[#allocation6 + $0x1b0] sm:$0xff]
    %v484 = vld [vmem:[#allocation6 + $0x1b8] sm:$0xff]
    %v485 = vld [vmem:[#allocation6 + $0x1c0] sm:$0xff]
    %v486 = vld [vmem:[#allocation6 + $0x1c8] sm:$0xff]
    %v487 = vld [vmem:[#allocation6 + $0x1d0] sm:$0xff]
    %v488 = vld [vmem:[#allocation6 + $0x1d8] sm:$0xff]
    %v489 = vld [vmem:[#allocation6 + $0x1e0] sm:$0xff]
    %v490 = vld [vmem:[#allocation6 + $0x1e8] sm:$0xff]
    %v491 = vld [vmem:[#allocation6 + $0x1f0] sm:$0xff]
    %v492 = vld [vmem:[#allocation6 + $0x1f8] sm:$0xff]
    %v493 = vld [vmem:[%s5] sm:$0x3]
    %v495 = vlaneseq
    %v496 = vshrl.u32 %v495, 7
    %v497 = vsub.s32 0, %v496
    %v498 = vrot.slane %v493, %v497
    %v499 = vlaneseq
    %v500 = vshrl.u32 %v499, 7
    %v501 = vsub.s32 1, %v500
    %v502 = vrot.slane %v493, %v501
    %505 = vmatprep.subr.mxu0 %v430
    %506 = vmatpush1.msra.mxu0 %v429
    %507 = vmatprep.subr.mxu0 %v432
    %508 = vmatpush1.msra.mxu0 %v431
    %509 = vmatprep.subr.mxu0 %v434
    %510 = vmatpush1.msra.mxu0 %v433
    %511 = vmatprep.subr.mxu0 %v436
    %512 = vmatpush1.msra.mxu0 %v435
    %513 = vmatprep.subr.mxu0 %v438
    %514 = vmatpush1.msra.mxu0 %v437
    %515 = vmatprep.subr.mxu0 %v440
    %516 = vmatpush1.msra.mxu0 %v439
    %517 = vmatprep.subr.mxu0 %v442
    %518 = vmatpush1.msra.mxu0 %v441
    %519 = vmatprep.subr.mxu0 %v444
    %520 = vmatpush1.msra.mxu0 %v443
    %521 = vmatprep.subr.mxu0 %v446
    %522 = vmatpush1.msra.mxu0 %v445
    %523 = vmatprep.subr.mxu0 %v448
    %524 = vmatpush1.msra.mxu0 %v447
    %525 = vmatprep.subr.mxu0 %v450
    %526 = vmatpush1.msra.mxu0 %v449
    %527 = vmatprep.subr.mxu0 %v452
    %528 = vmatpush1.msra.mxu0 %v451
    %529 = vmatprep.subr.mxu0 %v454
    %530 = vmatpush1.msra.mxu0 %v453
    %531 = vmatprep.subr.mxu0 %v456
    %532 = vmatpush1.msra.mxu0 %v455
    %533 = vmatprep.subr.mxu0 %v458
    %534 = vmatpush1.msra.mxu0 %v457
    %535 = vmatprep.subr.mxu0 %v460
    %536 = vmatpush1.msra.mxu0 %v459
    %537 = vmatprep.subr.mxu0 %v462
    %538 = vmatpush1.msra.mxu0 %v461
    %539 = vmatprep.subr.mxu0 %v464
    %540 = vmatpush1.msra.mxu0 %v463
    %541 = vmatprep.subr.mxu0 %v466
    %542 = vmatpush1.msra.mxu0 %v465
    %543 = vmatprep.subr.mxu0 %v468
    %544 = vmatpush1.msra.mxu0 %v467
    %545 = vmatprep.subr.mxu0 %v470
    %546 = vmatpush1.msra.mxu0 %v469
    %547 = vmatprep.subr.mxu0 %v472
    %548 = vmatpush1.msra.mxu0 %v471
    %549 = vmatprep.subr.mxu0 %v474
    %550 = vmatpush1.msra.mxu0 %v473
    %551 = vmatprep.subr.mxu0 %v476
    %552 = vmatpush1.msra.mxu0 %v475
    %553 = vmatprep.subr.mxu0 %v478
    %554 = vmatpush1.msra.mxu0 %v477
    %555 = vmatprep.subr.mxu0 %v480
    %556 = vmatpush1.msra.mxu0 %v479
    %557 = vmatprep.subr.mxu0 %v482
    %558 = vmatpush1.msra.mxu0 %v481
    %559 = vmatprep.subr.mxu0 %v484
    %560 = vmatpush1.msra.mxu0 %v483
    %561 = vmatprep.subr.mxu0 %v486
    %562 = vmatpush1.msra.mxu0 %v485
    %563 = vmatprep.subr.mxu0 %v488
    %564 = vmatpush1.msra.mxu0 %v487
    %565 = vmatprep.subr.mxu0 %v490
    %566 = vmatpush1.msra.mxu0 %v489
    %567 = vmatprep.subr.mxu0 %v492
    %568 = vmatpush1.msra.mxu0 %v491
    %569 = vmatprep.mubr.f32.mxu0 %v398
    %570 = vmatmul.mubr.f32.gmra.mrb[0].mxu0 %v397
    %v571 = vpop.f32.mrb[0].mxu0
    %v572 = vadd.f32 %v498, %v571
    %v573 = vpop.f32.mrb[0].mxu0
    %v574 = vadd.f32 %v502, %v573
    %575 = vmatprep.mubr.f32.mxu0 %v400
    %576 = vmatmul.mubr.f32.gmra.mrb[0].mxu0 %v399
    %v577 = vpop.f32.mrb[0].mxu0
    %v578 = vadd.f32 %v498, %v577
    %v579 = vpop.f32.mrb[0].mxu0
    %v580 = vadd.f32 %v502, %v579
    %581 = vmatprep.mubr.f32.mxu0 %v402
    %582 = vmatmul.mubr.f32.gmra.mrb[0].mxu0 %v401
    %v583 = vpop.f32.mrb[0].mxu0
    %v584 = vadd.f32 %v498, %v583
    %v585 = vpop.f32.mrb[0].mxu0
    %v586 = vadd.f32 %v502, %v585
    %587 = vmatprep.mubr.f32.mxu0 %v404
    %588 = vmatmul.mubr.f32.gmra.mrb[0].mxu0 %v403
    %v589 = vpop.f32.mrb[0].mxu0
    %v590 = vadd.f32 %v498, %v589
    %v591 = vpop.f32.mrb[0].mxu0
    %v592 = vadd.f32 %v502, %v591
    %593 = vmatprep.mubr.f32.mxu0 %v406
    %594 = vmatmul.mubr.f32.gmra.mrb[0].mxu0 %v405
    %v595 = vpop.f32.mrb[0].mxu0
    %v596 = vadd.f32 %v498, %v595
    %v597 = vpop.f32.mrb[0].mxu0
    %v598 = vadd.f32 %v502, %v597
    %599 = vmatprep.mubr.f32.mxu0 %v408
    %600 = vmatmul.mubr.f32.gmra.mrb[0].mxu0 %v407
    %v601 = vpop.f32.mrb[0].mxu0
    %v602 = vadd.f32 %v498, %v601
    %v603 = vpop.f32.mrb[0].mxu0
    %v604 = vadd.f32 %v502, %v603
    %605 = vmatprep.mubr.f32.mxu0 %v410
    %606 = vmatmul.mubr.f32.gmra.mrb[0].mxu0 %v409
    %v607 = vpop.f32.mrb[0].mxu0
    %v608 = vadd.f32 %v498, %v607
    %v609 = vpop.f32.mrb[0].mxu0
    %v610 = vadd.f32 %v502, %v609
    %611 = vmatprep.mubr.f32.mxu0 %v412
    %612 = vmatmul.mubr.f32.gmra.mrb[0].mxu0 %v411
    %v613 = vpop.f32.mrb[0].mxu0
    %v614 = vadd.f32 %v498, %v613
    %v615 = vpop.f32.mrb[0].mxu0
    %v616 = vadd.f32 %v502, %v615
    %617 = vmatprep.mubr.f32.mxu0 %v414
    %618 = vmatmul.mubr.f32.gmra.mrb[0].mxu0 %v413
    %v619 = vpop.f32.mrb[0].mxu0
    %v620 = vadd.f32 %v498, %v619
    %v621 = vpop.f32.mrb[0].mxu0
    %v622 = vadd.f32 %v502, %v621
    %623 = vmatprep.mubr.f32.mxu0 %v416
    %624 = vmatmul.mubr.f32.gmra.mrb[0].mxu0 %v415
    %v625 = vpop.f32.mrb[0].mxu0
    %v626 = vadd.f32 %v498, %v625
    %v627 = vpop.f32.mrb[0].mxu0
    %v628 = vadd.f32 %v502, %v627
    %629 = vmatprep.mubr.f32.mxu0 %v418
    %630 = vmatmul.mubr.f32.gmra.mrb[0].mxu0 %v417
    %v631 = vpop.f32.mrb[0].mxu0
    %v632 = vadd.f32 %v498, %v631
    %v633 = vpop.f32.mrb[0].mxu0
    %v634 = vadd.f32 %v502, %v633
    %635 = vmatprep.mubr.f32.mxu0 %v420
    %636 = vmatmul.mubr.f32.gmra.mrb[0].mxu0 %v419
    %v637 = vpop.f32.mrb[0].mxu0
    %v638 = vadd.f32 %v498, %v637
    %v639 = vpop.f32.mrb[0].mxu0
    %v640 = vadd.f32 %v502, %v639
    %641 = vmatprep.mubr.f32.mxu0 %v422
    %642 = vmatmul.mubr.f32.gmra.mrb[0].mxu0 %v421
    %v643 = vpop.f32.mrb[0].mxu0
    %v644 = vadd.f32 %v498, %v643
    %v645 = vpop.f32.mrb[0].mxu0
    %v646 = vadd.f32 %v502, %v645
    %647 = vmatprep.mubr.f32.mxu0 %v424
    %648 = vmatmul.mubr.f32.gmra.mrb[0].mxu0 %v423
    %v649 = vpop.f32.mrb[0].mxu0
    %v650 = vadd.f32 %v498, %v649
    %v651 = vpop.f32.mrb[0].mxu0
    %v652 = vadd.f32 %v502, %v651
    %653 = vmatprep.mubr.f32.mxu0 %v426
    %654 = vmatmul.mubr.f32.gmra.mrb[0].mxu0 %v425
    %v655 = vpop.f32.mrb[0].mxu0
    %v656 = vadd.f32 %v498, %v655
    %v657 = vpop.f32.mrb[0].mxu0
    %v658 = vadd.f32 %v502, %v657
    %659 = vmatprep.mubr.f32.mxu0 %v428
    %660 = vmatmul.mubr.f32.gmra.mrb[0].mxu0 %v427
    %v661 = vpop.f32.mrb[0].mxu0
    %v662 = vadd.f32 %v498, %v661
    %v663 = vpop.f32.mrb[0].mxu0
    %v664 = vadd.f32 %v502, %v663
    %665 = vdwg.mxu0
    %v666 = vmax.f32 %v572, 0.0
    %v667 = vmax.f32 %v574, 0.0
    %v668 = vmax.f32 %v578, 0.0
    %v669 = vmax.f32 %v580, 0.0
    %v670 = vmax.f32 %v584, 0.0
    %v671 = vmax.f32 %v586, 0.0
    %v672 = vmax.f32 %v590, 0.0
    %v673 = vmax.f32 %v592, 0.0
    %v674 = vmax.f32 %v596, 0.0
    %v675 = vmax.f32 %v598, 0.0
    %v676 = vmax.f32 %v602, 0.0
    %v677 = vmax.f32 %v604, 0.0
    %v678 = vmax.f32 %v608, 0.0
    %v679 = vmax.f32 %v610, 0.0
    %v680 = vmax.f32 %v614, 0.0
    %v681 = vmax.f32 %v616, 0.0
    %v682 = vmax.f32 %v620, 0.0
    %v683 = vmax.f32 %v622, 0.0
    %v684 = vmax.f32 %v626, 0.0
    %v685 = vmax.f32 %v628, 0.0
    %v686 = vmax.f32 %v632, 0.0
    %v687 = vmax.f32 %v634, 0.0
    %v688 = vmax.f32 %v638, 0.0
    %v689 = vmax.f32 %v640, 0.0
    %v690 = vmax.f32 %v644, 0.0
    %v691 = vmax.f32 %v646, 0.0
    %v692 = vmax.f32 %v650, 0.0
    %v693 = vmax.f32 %v652, 0.0
    %v694 = vmax.f32 %v656, 0.0
    %v695 = vmax.f32 %v658, 0.0
    %v696 = vmax.f32 %v662, 0.0
    %v697 = vmax.f32 %v664, 0.0
    %v698 = vld [vmem:[%s6] sm:$0x3]
    %v700 = vlaneseq
    %v701 = vshrl.u32 %v700, 7
    %v702 = vsub.s32 0, %v701
    %v703 = vrot.slane %v698, %v702
    %v704 = vlaneseq
    %v705 = vshrl.u32 %v704, 7
    %v706 = vsub.s32 1, %v705
    %v707 = vrot.slane %v698, %v706
    %v710 = vmul.f32 %v666, %v703
    %v711 = vmul.f32 %v667, %v707
    %v712 = vmul.f32 %v668, %v703
    %v713 = vmul.f32 %v669, %v707
    %v714 = vmul.f32 %v670, %v703
    %v715 = vmul.f32 %v671, %v707
    %v716 = vmul.f32 %v672, %v703
    %v717 = vmul.f32 %v673, %v707
    %v718 = vmul.f32 %v674, %v703
    %v719 = vmul.f32 %v675, %v707
    %v720 = vmul.f32 %v676, %v703
    %v721 = vmul.f32 %v677, %v707
    %v722 = vmul.f32 %v678, %v703
    %v723 = vmul.f32 %v679, %v707
    %v724 = vmul.f32 %v680, %v703
    %v725 = vmul.f32 %v681, %v707
    %v726 = vmul.f32 %v682, %v703
    %v727 = vmul.f32 %v683, %v707
    %v728 = vmul.f32 %v684, %v703
    %v729 = vmul.f32 %v685, %v707
    %v730 = vmul.f32 %v686, %v703
    %v731 = vmul.f32 %v687, %v707
    %v732 = vmul.f32 %v688, %v703
    %v733 = vmul.f32 %v689, %v707
    %v734 = vmul.f32 %v690, %v703
    %v735 = vmul.f32 %v691, %v707
    %v736 = vmul.f32 %v692, %v703
    %v737 = vmul.f32 %v693, %v707
    %v738 = vmul.f32 %v694, %v703
    %v739 = vmul.f32 %v695, %v707
    %v740 = vmul.f32 %v696, %v703
    %v741 = vmul.f32 %v697, %v707
    %v742 = vadd.f32 %v710, %v711
    %743 = vadd.xlane.f32.xlu0 %v742
    %v744 = vpop.xlane.xlu0 %743
    %v745 = vadd.f32 %v712, %v713
    %746 = vadd.xlane.f32.xlu0 %v745
    %v747 = vpop.xlane.xlu0 %746
    %v748 = vadd.f32 %v714, %v715
    %749 = vadd.xlane.f32.xlu0 %v748
    %v750 = vpop.xlane.xlu0 %749
    %v751 = vadd.f32 %v716, %v717
    %752 = vadd.xlane.f32.xlu0 %v751
    %v753 = vpop.xlane.xlu0 %752
    %v754 = vadd.f32 %v718, %v719
    %755 = vadd.xlane.f32.xlu0 %v754
    %v756 = vpop.xlane.xlu0 %755
    %v757 = vadd.f32 %v720, %v721
    %758 = vadd.xlane.f32.xlu0 %v757
    %v759 = vpop.xlane.xlu0 %758
    %v760 = vadd.f32 %v722, %v723
    %761 = vadd.xlane.f32.xlu0 %v760
    %v762 = vpop.xlane.xlu0 %761
    %v763 = vadd.f32 %v724, %v725
    %764 = vadd.xlane.f32.xlu0 %v763
    %v765 = vpop.xlane.xlu0 %764
    %v766 = vadd.f32 %v726, %v727
    %767 = vadd.xlane.f32.xlu0 %v766
    %v768 = vpop.xlane.xlu0 %767
    %v769 = vadd.f32 %v728, %v729
    %770 = vadd.xlane.f32.xlu0 %v769
    %v771 = vpop.xlane.xlu0 %770
    %v772 = vadd.f32 %v730, %v731
    %773 = vadd.xlane.f32.xlu0 %v772
    %v774 = vpop.xlane.xlu0 %773
    %v775 = vadd.f32 %v732, %v733
    %776 = vadd.xlane.f32.xlu0 %v775
    %v777 = vpop.xlane.xlu0 %776
    %v778 = vadd.f32 %v734, %v735
    %779 = vadd.xlane.f32.xlu0 %v778
    %v780 = vpop.xlane.xlu0 %779
    %v781 = vadd.f32 %v736, %v737
    %782 = vadd.xlane.f32.xlu0 %v781
    %v783 = vpop.xlane.xlu0 %782
    %v784 = vadd.f32 %v738, %v739
    %785 = vadd.xlane.f32.xlu0 %v784
    %v786 = vpop.xlane.xlu0 %785
    %v787 = vadd.f32 %v740, %v741
    %788 = vadd.xlane.f32.xlu0 %v787
    %v789 = vpop.xlane.xlu0 %788
    %v790 = vld [vmem:[#allocation2] sm:$0x1]
    %v792 = vlaneseq
    %v793 = vshrl.u32 %v792, 7
    %v794 = vsub.s32 0, %v793
    %v795 = vrot.slane %v790, %v794
    %v797 = vadd.f32 %v744, %v795
    %v798 = vadd.f32 %v747, %v795
    %v799 = vadd.f32 %v750, %v795
    %v800 = vadd.f32 %v753, %v795
    %v801 = vadd.f32 %v756, %v795
    %v802 = vadd.f32 %v759, %v795
    %v803 = vadd.f32 %v762, %v795
    %v804 = vadd.f32 %v765, %v795
    %v805 = vadd.f32 %v768, %v795
    %v806 = vadd.f32 %v771, %v795
    %v807 = vadd.f32 %v774, %v795
    %v808 = vadd.f32 %v777, %v795
    %v809 = vadd.f32 %v780, %v795
    %v810 = vadd.f32 %v783, %v795
    %v811 = vadd.f32 %v786, %v795
    %v812 = vadd.f32 %v789, %v795
    %829 = vset.pattern.permute.xlu0 0
    %830 = vperm.xlu0 %829, %v797
    %v831 = vpop.permute.xlu0 %830
    %832 = vset.pattern.permute.xlu0 0
    %833 = vperm.xlu0 %832, %v798
    %v834 = vpop.permute.xlu0 %833
    %835 = vset.pattern.permute.xlu0 0
    %836 = vperm.xlu0 %835, %v799
    %v837 = vpop.permute.xlu0 %836
    %838 = vset.pattern.permute.xlu0 0
    %839 = vperm.xlu0 %838, %v800
    %v840 = vpop.permute.xlu0 %839
    %841 = vset.pattern.permute.xlu0 0
    %842 = vperm.xlu0 %841, %v801
    %v843 = vpop.permute.xlu0 %842
    %844 = vset.pattern.permute.xlu0 0
    %845 = vperm.xlu0 %844, %v802
    %v846 = vpop.permute.xlu0 %845
    %847 = vset.pattern.permute.xlu0 0
    %848 = vperm.xlu0 %847, %v803
    %v849 = vpop.permute.xlu0 %848
    %850 = vset.pattern.permute.xlu0 0
    %851 = vperm.xlu0 %850, %v804
    %v852 = vpop.permute.xlu0 %851
    %853 = vset.pattern.permute.xlu0 0
    %854 = vperm.xlu0 %853, %v805
    %v855 = vpop.permute.xlu0 %854
    %856 = vset.pattern.permute.xlu0 0
    %857 = vperm.xlu0 %856, %v806
    %v858 = vpop.permute.xlu0 %857
    %859 = vset.pattern.permute.xlu0 0
    %860 = vperm.xlu0 %859, %v807
    %v861 = vpop.permute.xlu0 %860
    %862 = vset.pattern.permute.xlu0 0
    %863 = vperm.xlu0 %862, %v808
    %v864 = vpop.permute.xlu0 %863
    %865 = vset.pattern.permute.xlu0 0
    %866 = vperm.xlu0 %865, %v809
    %v867 = vpop.permute.xlu0 %866
    %868 = vset.pattern.permute.xlu0 0
    %869 = vperm.xlu0 %868, %v810
    %v870 = vpop.permute.xlu0 %869
    %871 = vset.pattern.permute.xlu0 0
    %872 = vperm.xlu0 %871, %v811
    %v873 = vpop.permute.xlu0 %872
    %874 = vset.pattern.permute.xlu0 0
    %875 = vperm.xlu0 %874, %v812
    %v876 = vpop.permute.xlu0 %875
    %v877 = vlaneseq
    %v878 = vand.u32 %v877, 127
    %v879 = vlaneseq
    %v880 = vshrl.u32 %v879, 7
    %v881 = vsub.s32 %v878, %v880
    %v882 = vrot.slane %v831, %v881
    %v883 = vadd.s32 %v878, 4294967288
    %v884 = vlaneseq
    %v885 = vshrl.u32 %v884, 7
    %v886 = vsub.s32 %v883, %v885
    %v887 = vrot.slane %v834, %v886
    %vm888 = vcmask 130112
    %v889 = vsel %vm888, %v887, %v882
    %v890 = vadd.s32 %v878, 4294967280
    %v891 = vlaneseq
    %v892 = vshrl.u32 %v891, 7
    %v893 = vsub.s32 %v890, %v892
    %v894 = vrot.slane %v837, %v893
    %vm895 = vcmask 195712
    %v896 = vsel %vm895, %v894, %v889
    %v897 = vadd.s32 %v878, 4294967272
    %v898 = vlaneseq
    %v899 = vshrl.u32 %v898, 7
    %v900 = vsub.s32 %v897, %v899
    %v901 = vrot.slane %v840, %v900
    %vm902 = vcmask 261312
    %v903 = vsel %vm902, %v901, %v896
    %v904 = vadd.s32 %v878, 4294967264
    %v905 = vlaneseq
    %v906 = vshrl.u32 %v905, 7
    %v907 = vsub.s32 %v904, %v906
    %v908 = vrot.slane %v843, %v907
    %vm909 = vcmask 326912
    %v910 = vsel %vm909, %v908, %v903
    %v911 = vadd.s32 %v878, 4294967256
    %v912 = vlaneseq
    %v913 = vshrl.u32 %v912, 7
    %v914 = vsub.s32 %v911, %v913
    %v915 = vrot.slane %v846, %v914
    %vm916 = vcmask 392512
    %v917 = vsel %vm916, %v915, %v910
    %v918 = vadd.s32 %v878, 4294967248
    %v919 = vlaneseq
    %v920 = vshrl.u32 %v919, 7
    %v921 = vsub.s32 %v918, %v920
    %v922 = vrot.slane %v849, %v921
    %vm923 = vcmask 458112
    %v924 = vsel %vm923, %v922, %v917
    %v925 = vadd.s32 %v878, 4294967240
    %v926 = vlaneseq
    %v927 = vshrl.u32 %v926, 7
    %v928 = vsub.s32 %v925, %v927
    %v929 = vrot.slane %v852, %v928
    %vm930 = vcmask 523712
    %v931 = vsel %vm930, %v929, %v924
    %v932 = vadd.s32 %v878, 4294967232
    %v933 = vlaneseq
    %v934 = vshrl.u32 %v933, 7
    %v935 = vsub.s32 %v932, %v934
    %v936 = vrot.slane %v855, %v935
    %vm937 = vcmask 589312
    %v938 = vsel %vm937, %v936, %v931
    %v939 = vadd.s32 %v878, 4294967224
    %v940 = vlaneseq
    %v941 = vshrl.u32 %v940, 7
    %v942 = vsub.s32 %v939, %v941
    %v943 = vrot.slane %v858, %v942
    %vm944 = vcmask 654912
    %v945 = vsel %vm944, %v943, %v938
    %v946 = vadd.s32 %v878, 4294967216
    %v947 = vlaneseq
    %v948 = vshrl.u32 %v947, 7
    %v949 = vsub.s32 %v946, %v948
    %v950 = vrot.slane %v861, %v949
    %vm951 = vcmask 720512
    %v952 = vsel %vm951, %v950, %v945
    %v953 = vadd.s32 %v878, 4294967208
    %v954 = vlaneseq
    %v955 = vshrl.u32 %v954, 7
    %v956 = vsub.s32 %v953, %v955
    %v957 = vrot.slane %v864, %v956
    %vm958 = vcmask 786112
    %v959 = vsel %vm958, %v957, %v952
    %v960 = vadd.s32 %v878, 4294967200
    %v961 = vlaneseq
    %v962 = vshrl.u32 %v961, 7
    %v963 = vsub.s32 %v960, %v962
    %v964 = vrot.slane %v867, %v963
    %vm965 = vcmask 851712
    %v966 = vsel %vm965, %v964, %v959
    %v967 = vadd.s32 %v878, 4294967192
    %v968 = vlaneseq
    %v969 = vshrl.u32 %v968, 7
    %v970 = vsub.s32 %v967, %v969
    %v971 = vrot.slane %v870, %v970
    %vm972 = vcmask 917312
    %v973 = vsel %vm972, %v971, %v966
    %v974 = vadd.s32 %v878, 4294967184
    %v975 = vlaneseq
    %v976 = vshrl.u32 %v975, 7
    %v977 = vsub.s32 %v974, %v976
    %v978 = vrot.slane %v873, %v977
    %vm979 = vcmask 982912
    %v980 = vsel %vm979, %v978, %v973
    %v981 = vadd.s32 %v878, 4294967176
    %v982 = vlaneseq
    %v983 = vshrl.u32 %v982, 7
    %v984 = vsub.s32 %v981, %v983
    %v985 = vrot.slane %v876, %v984
    %vm986 = vcmask 1048512
    %v987 = vsel %vm986, %v985, %v980
    %989 = vst [vmem:[#allocation8] sm:$0x1] %v987
    // Predicated region
    $region42: #{tpu_custom_call.1} parent=1 // pred_check
      _
    $region43: #{tpu_custom_call.1} parent=1 // pred_check_branch
      %991 = sbr.rel (0) target = $region45
    $region44: #{tpu_custom_call.1} parent=1 // pred_region
      %s993 = ssub.s32 16, 16
      %994 = vsyncadd [#allocation5], %s993
      %s996 = sshll.u32 [#allocation8], 4
      %s997 = int_to_ptr.vmem [resolvable:$true] %s996
      %999 = dma.vmem_to_hbm [thread:$0]  %s997, 16, %s8, [#allocation5]
    $region45: #{tpu_custom_call.1} parent=1 // pred_fallthru
      _
    // Predicated region
    $region46: #{tpu_custom_call.1} parent=1 // pred_check
      _
    $region47: #{tpu_custom_call.1} parent=1 // pred_check_branch
      %1001 = sbr.rel (0) target = $region49
    $region48: #{tpu_custom_call.1} parent=1 // pred_region
      %1002 = dma.done [#allocation5], 16
    $region49: #{tpu_custom_call.1} parent=1 // pred_fallthru
      _
    %1003 = vsyncpa [#allocation4], 1
    %1004 = vsyncpa [#allocation7], 1
    %1005 = vsyncpa [#allocation5], 1

</llo_original>
